<compile_context>
chip_gen: v7x
topology: tpu7x:2x2x1
jax: 0.10.0
libtpu: 0.0.40
codegen_flags: <defaults>
</compile_context>

<pallas_src>
import math

import jax
import jax.numpy as jnp
from jax.experimental import pallas as pl
from jax.experimental.pallas import tpu as pltpu

_INV_SQRT2 = 1.0 / math.sqrt(2.0)


def _geglu_kernel(x_ref, w_ref, b_ref, o_ref, acc_ref):
    k = pl.program_id(2)

    @pl.when(k == 0)
    def _init():
        acc_ref[...] = jnp.zeros_like(acc_ref)

    tn = o_ref.shape[1]
    tk = x_ref.shape[1]

    # Fused value+gate matmul. w_ref is (2, tn, tk); merging the leading dims
    # is layout-free (tn is lane/sublane aligned).  Contract on the weight's
    # input-channel axis so no transpose is materialized in VMEM.
    w = w_ref[...].reshape(2 * tn, tk)
    acc_ref[...] += jax.lax.dot_general(
        x_ref[...], w,
        dimension_numbers=(((1,), (1,)), ((), ())),
        preferred_element_type=jnp.float32,
    )

    @pl.when(k == pl.num_programs(2) - 1)
    def _finalize():
        acc = acc_ref[...]
        b = b_ref[...].astype(jnp.float32)            # (2, tn)
        h = acc[:, :tn] + b[0, :]                     # value half
        g = acc[:, tn:] + b[1, :]                     # gate half
        # exact erf GELU (matches torch.nn.functional.gelu, approximate='none')
        gelu_g = 0.5 * g * (1.0 + jax.lax.erf(g * _INV_SQRT2))
        o_ref[...] = (h * gelu_g).astype(o_ref.dtype)


def _round_up(v, m):
    return (v + m - 1) // m * m


def geglu(x, weight, bias, *, tile_m=None, tile_n=None, tile_k=None):
    """GEGLU forward.

    x:      (..., in_channels)
    weight: (2*out_channels, in_channels)   -- torch nn.Linear layout
    bias:   (2*out_channels,)
    returns (..., out_channels)
    """
    *lead, cin = x.shape
    two_out, cin_w = weight.shape
    assert cin == cin_w and two_out % 2 == 0
    cout = two_out // 2
    out_dtype = x.dtype

    # Lane-dense output channels: pad cout to a multiple of 128 (no-op for
    # realistic layer widths).  The (2, cout, cin) view of the torch weight is
    # a free reshape -- no transpose / concatenation traffic in HBM.
    cout_p = _round_up(cout, 128)
    w3 = weight.reshape(2, cout, cin)
    b2 = bias.reshape(2, cout)
    if cout_p != cout:
        w3 = jnp.pad(w3, ((0, 0), (0, cout_p - cout), (0, 0)))
        b2 = jnp.pad(b2, ((0, 0), (0, cout_p - cout)))

    # Flatten leading dims to rows.
    m = 1
    for d in lead:
        m *= d
    x2 = x.reshape(m, cin)

    # K handling: keep cin as-is when it is 128-aligned or small enough to be
    # a single full-extent block; otherwise zero-pad to 128 lanes so the
    # reduction axis can still be tiled (padded K contributes exactly zero).
    cin_p = cin
    if cin % 128 != 0 and cin > 1024:
        cin_p = _round_up(cin, 128)
        x2 = jnp.pad(x2, ((0, 0), (0, cin_p - cin)))
        w3 = jnp.pad(w3, ((0, 0), (0, 0), (0, cin_p - cin)))

    if tile_m is None:
        tile_m = min(256, _round_up(m, 16))    # 16-row granule also covers bf16 sublanes
    if tile_n is None:
        tile_n = next(c for c in (512, 256, 128) if cout_p % c == 0)
    if tile_k is None:
        if cin_p % 128 == 0:
            tile_k = next(c for c in (512, 256, 128) if cin_p % c == 0)
        else:
            tile_k = cin_p                     # small cin: full-extent K block (allowed)

    # Pad rows to the row tile (no divisibility assert -> arbitrary batch*seq).
    m_p = _round_up(m, tile_m)
    if m_p != m:
        x2 = jnp.pad(x2, ((0, m_p - m), (0, 0)))

    grid = (m_p // tile_m, cout_p // tile_n, cin_p // tile_k)

    # VMEM budget: double-buffered inputs/outputs + f32 accumulator + headroom,
    # capped below v7x's 64 MiB physical VMEM.
    est = (
        2 * (tile_m * tile_k * x2.dtype.itemsize
             + 2 * tile_n * tile_k * w3.dtype.itemsize
             + 2 * tile_n * b2.dtype.itemsize
             + tile_m * tile_n * jnp.dtype(out_dtype).itemsize)
        + tile_m * 2 * tile_n * 4
    )
    vmem_limit = int(min(max(2 * est, 32 << 20), 56 << 20))

    cost = pl.CostEstimate(
        flops=2 * m_p * (2 * cout_p) * cin_p,
        transcendentals=m_p * cout_p,
        bytes_accessed=(
            x2.size * x2.dtype.itemsize
            + w3.size * w3.dtype.itemsize * (m_p // tile_m)
            + b2.size * b2.dtype.itemsize
            + m_p * cout_p * jnp.dtype(out_dtype).itemsize
        ),
    )

    out2 = pl.pallas_call(
        _geglu_kernel,
        out_shape=jax.ShapeDtypeStruct((m_p, cout_p), out_dtype),
        grid_spec=pltpu.PrefetchScalarGridSpec(
            num_scalar_prefetch=0,
            grid=grid,
            in_specs=[
                pl.BlockSpec((tile_m, tile_k), lambda i, j, k: (i, k)),        # x rows
                pl.BlockSpec((2, tile_n, tile_k), lambda i, j, k: (0, j, k)),  # W (value+gate)
                pl.BlockSpec((2, tile_n), lambda i, j, k: (0, j)),             # bias
            ],
            out_specs=pl.BlockSpec((tile_m, tile_n), lambda i, j, k: (i, j)),
            scratch_shapes=[pltpu.VMEM((tile_m, 2 * tile_n), jnp.float32)],
        ),
        compiler_params=pltpu.CompilerParams(
            dimension_semantics=("parallel", "parallel", "arbitrary"),
            vmem_limit_bytes=vmem_limit,
        ),
        cost_estimate=cost,
    )(x2, w3, b2)

    out = out2[:m, :cout]
    return out.reshape(*lead, cout)


def geglu_ref(x, weight, bias):
    """Pure-JAX reference matching the PyTorch module."""
    proj = jnp.einsum("...i,oi->...o", x, weight) + bias
    h, g = jnp.split(proj, 2, axis=-1)
    return h * (0.5 * g * (1.0 + jax.lax.erf(g / jnp.sqrt(2.0))))


if __name__ == "__main__":
    key = jax.random.PRNGKey(0)
    batch, seq, cin, cout = 2, 8, 32, 32

    k_x, k_w, k_b = jax.random.split(key, 3)
    x = jax.random.normal(k_x, (batch, seq, cin), dtype=jnp.float32)
    # deterministic nn.Linear-style init (uniform(-1/sqrt(cin), 1/sqrt(cin)))
    bound = 1.0 / math.sqrt(cin)
    weight = jax.random.uniform(k_w, (2 * cout, cin), jnp.float32, -bound, bound)
    bias = jax.random.uniform(k_b, (2 * cout,), jnp.float32, -bound, bound)

    out = geglu(x, weight, bias)
    out = jax.block_until_ready(out)

    ref = geglu_ref(x, weight, bias)
    assert out.shape == (batch, seq, cout)
    assert jnp.allclose(out, ref, atol=1e-5, rtol=1e-5), "mismatch vs reference"

    print("KERNEL_OK")
</pallas_src>

<mosaic_0001>
module attributes {stable_mosaic.version = 11 : i64} {
  func.func @_geglu_kernel(%arg0: i32, %arg1: i32, %arg2: i32, %arg3: memref<16x32xf32, #tpu.memory_space<vmem>>, %arg4: memref<2x128x32xf32, #tpu.memory_space<vmem>>, %arg5: memref<2x128xf32, #tpu.memory_space<vmem>>, %arg6: memref<16x128xf32, #tpu.memory_space<vmem>>, %arg7: memref<16x256xf32, #tpu.memory_space<vmem>>) attributes {dimension_semantics = [#tpu.dimension_semantics<parallel>, #tpu.dimension_semantics<parallel>, #tpu.dimension_semantics<arbitrary>], iteration_bounds = array<i64: 1, 1, 1>, scalar_prefetch = 0 : i64, scratch_operands = 1 : i64, tpu.core_type = #tpu.core_type<tc>, window_params = [{transform_indices = @transform_0, window_bounds = array<i64: 16, 32>}, {transform_indices = @transform_1, window_bounds = array<i64: 2, 128, 32>}, {transform_indices = @transform_2, window_bounds = array<i64: 2, 128>}, {transform_indices = @transform_3, window_bounds = array<i64: 16, 128>}]} {
    %c0_i32 = arith.constant 0 : i32
    %0 = arith.cmpi eq, %arg2, %c0_i32 : i32
    %1 = arith.extui %0 : i1 to i32
    %c0_i32_0 = arith.constant 0 : i32
    %2 = arith.cmpi ne, %1, %c0_i32_0 : i32
    scf.if %2 {
      %cst_11 = arith.constant 0.000000e+00 : f32
      %13 = vector.broadcast %cst_11 : f32 to vector<16x256xf32>
      %c0_12 = arith.constant 0 : index
      %c0_13 = arith.constant 0 : index
      %14 = vector.load %arg7[%c0_12, %c0_13] : memref<16x256xf32, #tpu.memory_space<vmem>>, vector<16x256xf32>
      tpu.vector_store %arg7[%c0_12, %c0_13], %13 {strides = array<i32>} : memref<16x256xf32, #tpu.memory_space<vmem>>, vector<16x256xf32>,
    } else {
    }
    %c0 = arith.constant 0 : index
    %c0_1 = arith.constant 0 : index
    %c0_2 = arith.constant 0 : index
    %3 = vector.load %arg4[%c0, %c0_1, %c0_2] : memref<2x128x32xf32, #tpu.memory_space<vmem>>, vector<2x128x32xf32>
    %4 = vector.shape_cast %3 : vector<2x128x32xf32> to vector<256x32xf32>
    %c0_3 = arith.constant 0 : index
    %c0_4 = arith.constant 0 : index
    %5 = vector.load %arg7[%c0_3, %c0_4] : memref<16x256xf32, #tpu.memory_space<vmem>>, vector<16x256xf32>
    %c0_5 = arith.constant 0 : index
    %c0_6 = arith.constant 0 : index
    %6 = vector.load %arg3[%c0_5, %c0_6] : memref<16x32xf32, #tpu.memory_space<vmem>>, vector<16x32xf32>
    %cst = arith.constant dense<0.000000e+00> : vector<16x256xf32>
    %7 = tpu.matmul %6, %4, %cst {dimension_numbers = #tpu.dot_dimension_numbers<[1], [1], [0], [0], [0, 0, 1, 0], [], []>} : vector<16x32xf32>, vector<256x32xf32>, vector<16x256xf32> -> vector<16x256xf32>
    %8 = arith.addf %5, %7 : vector<16x256xf32>
    %c0_7 = arith.constant 0 : index
    %c0_8 = arith.constant 0 : index
    %9 = vector.load %arg7[%c0_7, %c0_8] : memref<16x256xf32, #tpu.memory_space<vmem>>, vector<16x256xf32>
    tpu.vector_store %arg7[%c0_7, %c0_8], %8 {strides = array<i32>} : memref<16x256xf32, #tpu.memory_space<vmem>>, vector<16x256xf32>,
    %c0_i32_9 = arith.constant 0 : i32
    %10 = arith.cmpi eq, %arg2, %c0_i32_9 : i32
    %11 = arith.extui %10 : i1 to i32
    %c0_i32_10 = arith.constant 0 : i32
    %12 = arith.cmpi ne, %11, %c0_i32_10 : i32
    scf.if %12 {
      %c0_11 = arith.constant 0 : index
      %c0_12 = arith.constant 0 : index
      %13 = vector.load %arg7[%c0_11, %c0_12] : memref<16x256xf32, #tpu.memory_space<vmem>>, vector<16x256xf32>
      %c0_13 = arith.constant 0 : index
      %c0_14 = arith.constant 0 : index
      %14 = vector.load %arg5[%c0_13, %c0_14] : memref<2x128xf32, #tpu.memory_space<vmem>>, vector<2x128xf32>
      %15 = vector.extract_strided_slice %13 {offsets = [0, 0], sizes = [16, 128], strides = [1, 1]} : vector<16x256xf32> to vector<16x128xf32>
      %16 = vector.extract_strided_slice %14 {offsets = [0, 0], sizes = [1, 128], strides = [1, 1]} : vector<2x128xf32> to vector<1x128xf32>
      %17 = vector.shape_cast %16 : vector<1x128xf32> to vector<128xf32>
      %18 = vector.shape_cast %17 : vector<128xf32> to vector<1x128xf32>
      %19 = vector.broadcast %18 : vector<1x128xf32> to vector<16x128xf32>
      %20 = arith.addf %15, %19 : vector<16x128xf32>
      %21 = vector.extract_strided_slice %13 {offsets = [0, 128], sizes = [16, 128], strides = [1, 1]} : vector<16x256xf32> to vector<16x128xf32>
      %22 = vector.extract_strided_slice %14 {offsets = [1, 0], sizes = [1, 128], strides = [1, 1]} : vector<2x128xf32> to vector<1x128xf32>
      %23 = vector.shape_cast %22 : vector<1x128xf32> to vector<128xf32>
      %24 = vector.shape_cast %23 : vector<128xf32> to vector<1x128xf32>
      %25 = vector.broadcast %24 : vector<1x128xf32> to vector<16x128xf32>
      %26 = arith.addf %21, %25 : vector<16x128xf32>
      %cst_15 = arith.constant 5.000000e-01 : f32
      %27 = vector.broadcast %cst_15 : f32 to vector<16x128xf32>
      %28 = arith.mulf %27, %26 : vector<16x128xf32>
      %cst_16 = arith.constant 0.707106769 : f32
      %29 = vector.broadcast %cst_16 : f32 to vector<16x128xf32>
      %30 = arith.mulf %26, %29 : vector<16x128xf32>
      %31 = math.erf %30 : vector<16x128xf32>
      %cst_17 = arith.constant 1.000000e+00 : f32
      %32 = vector.broadcast %cst_17 : f32 to vector<16x128xf32>
      %33 = arith.addf %32, %31 : vector<16x128xf32>
      %34 = arith.mulf %28, %33 : vector<16x128xf32>
      %35 = arith.mulf %20, %34 : vector<16x128xf32>
      %c0_18 = arith.constant 0 : index
      %c0_19 = arith.constant 0 : index
      %36 = vector.load %arg6[%c0_18, %c0_19] : memref<16x128xf32, #tpu.memory_space<vmem>>, vector<16x128xf32>
      tpu.vector_store %arg6[%c0_18, %c0_19], %35 {strides = array<i32>} : memref<16x128xf32, #tpu.memory_space<vmem>>, vector<16x128xf32>,
    } else {
    }
    return
  }
  func.func @transform_0(%arg0: i32, %arg1: i32, %arg2: i32) -> (i32, i32) {
    %c0_i32 = arith.constant 0 : i32
    return %arg0, %arg2 : i32, i32
  }
  func.func @transform_1(%arg0: i32, %arg1: i32, %arg2: i32) -> (i32, i32, i32) {
    %c0_i32 = arith.constant 0 : i32
    %c0_i32_0 = arith.constant 0 : i32
    return %c0_i32, %arg1, %arg2 : i32, i32, i32
  }
  func.func @transform_2(%arg0: i32, %arg1: i32, %arg2: i32) -> (i32, i32) {
    %c0_i32 = arith.constant 0 : i32
    %c0_i32_0 = arith.constant 0 : i32
    return %c0_i32, %arg1 : i32, i32
  }
  func.func @transform_3(%arg0: i32, %arg1: i32, %arg2: i32) -> (i32, i32) {
    %c0_i32 = arith.constant 0 : i32
    return %arg0, %arg1 : i32, i32
  }
}

</mosaic_0001>

<llo_original>
// kernel: tpu_custom_call.1
$region0: #{tpu_custom_call.1}
  #allocation0 [shape = 'u32[]', space=smem, size = 0x4, offset = 0x4, fixed_abs, tag = 'smem constant byte address 0x4 - core index']
  #allocation1 [shape = 'u32[144,128]{1,0:T(1,128)}', space=vmem, size = 0x12000, scoped, tag = 'internal scratch']
  #allocation2 [shape = 'f32[16,256]{1,0:T(8,128)}', space=vmem, size = 0x4000, scoped, tag = 'scratch operand']
  %s0 = inlined_call_operand.vmem [shape: f32[16,32], index: 0, kind: input, shape index: {}]
  %s1 = inlined_call_operand.vmem [shape: f32[2,128,32], index: 1, kind: input, shape index: {}]
  %s2 = inlined_call_operand.vmem [shape: f32[2,128], index: 2, kind: input, shape index: {}]
  %s3 = inlined_call_operand.hbm [shape: f32[16,128], index: 3, kind: output, shape index: {}]
  %s4 = sld [smem:[#allocation0]]
  $region30: #{tpu_custom_call.1} parent=0
    _
  %s6 = ssub.s32 1, %s4
  %s7 = scalar_select 0, %s6, %s4
  $region1: #{tpu_custom_call.1} parent=0
    #allocation3 [shape = 'u8[8192]{0}', space=vmem, size = 0x2000, scoped, tag = 'output window, operand 0, single buffered']
    #allocation4 [shape = 's32[1]{0}', space=sflag, size = 0x4, scoped, tag = 'scoped memory for tpu_custom_call.1']
    %8 = vsyncpa [#allocation4], 0
    // Predicated region
    $region2: #{tpu_custom_call.1} parent=1 // pred_check
      _
    $region3: #{tpu_custom_call.1} parent=1 // pred_check_branch
      %10 = sbr.rel (0) target = $region5
    $region4: #{tpu_custom_call.1} parent=1 // pred_region
      _
    $region5: #{tpu_custom_call.1} parent=1 // pred_fallthru
      _
    // Predicated region
    $region6: #{tpu_custom_call.1} parent=1 // pred_check
      _
    $region7: #{tpu_custom_call.1} parent=1 // pred_check_branch
      %12 = sbr.rel (0) target = $region9
    $region8: #{tpu_custom_call.1} parent=1 // pred_region
      _
    $region9: #{tpu_custom_call.1} parent=1 // pred_fallthru
      _
    // Predicated region
    $region10: #{tpu_custom_call.1} parent=1 // pred_check
      _
    $region11: #{tpu_custom_call.1} parent=1 // pred_check_branch
      %14 = sbr.rel (0) target = $region13
    $region12: #{tpu_custom_call.1} parent=1 // pred_region
      _
    $region13: #{tpu_custom_call.1} parent=1 // pred_fallthru
      _
    %p15 = scmp.eq.s32.totalorder 0, 0
    // Predicated region
    $region14: #{tpu_custom_call.1} parent=1 // pred_check
      %p16 = pneg %p15
    $region15: #{tpu_custom_call.1} parent=1 // pred_check_branch
      %18 = sbr.rel (%p16) target = $region17
    $region16: #{tpu_custom_call.1} parent=1 // pred_region
      %19 = vst [vmem:[#allocation2] sm:$0xff] 0.0
      %20 = vst [vmem:[#allocation2 + $0x8] sm:$0xff] 0.0
      %21 = vst [vmem:[#allocation2 + $0x10] sm:$0xff] 0.0
      %22 = vst [vmem:[#allocation2 + $0x18] sm:$0xff] 0.0
    $region17: #{tpu_custom_call.1} parent=1 // pred_fallthru
      _
    %v23 = vld [vmem:[%s1] sm:$0xff]
    %v24 = vld [vmem:[%s1 + $0x8] sm:$0xff]
    %v25 = vld [vmem:[%s1 + $0x10] sm:$0xff]
    %v26 = vld [vmem:[%s1 + $0x18] sm:$0xff]
    %v27 = vld [vmem:[%s1 + $0x20] sm:$0xff]
    %v28 = vld [vmem:[%s1 + $0x28] sm:$0xff]
    %v29 = vld [vmem:[%s1 + $0x30] sm:$0xff]
    %v30 = vld [vmem:[%s1 + $0x38] sm:$0xff]
    %v31 = vld [vmem:[%s1 + $0x40] sm:$0xff]
    %v32 = vld [vmem:[%s1 + $0x48] sm:$0xff]
    %v33 = vld [vmem:[%s1 + $0x50] sm:$0xff]
    %v34 = vld [vmem:[%s1 + $0x58] sm:$0xff]
    %v35 = vld [vmem:[%s1 + $0x60] sm:$0xff]
    %v36 = vld [vmem:[%s1 + $0x68] sm:$0xff]
    %v37 = vld [vmem:[%s1 + $0x70] sm:$0xff]
    %v38 = vld [vmem:[%s1 + $0x78] sm:$0xff]
    %v39 = vld [vmem:[%s1 + $0x80] sm:$0xff]
    %v40 = vld [vmem:[%s1 + $0x88] sm:$0xff]
    %v41 = vld [vmem:[%s1 + $0x90] sm:$0xff]
    %v42 = vld [vmem:[%s1 + $0x98] sm:$0xff]
    %v43 = vld [vmem:[%s1 + $0xa0] sm:$0xff]
    %v44 = vld [vmem:[%s1 + $0xa8] sm:$0xff]
    %v45 = vld [vmem:[%s1 + $0xb0] sm:$0xff]
    %v46 = vld [vmem:[%s1 + $0xb8] sm:$0xff]
    %v47 = vld [vmem:[%s1 + $0xc0] sm:$0xff]
    %v48 = vld [vmem:[%s1 + $0xc8] sm:$0xff]
    %v49 = vld [vmem:[%s1 + $0xd0] sm:$0xff]
    %v50 = vld [vmem:[%s1 + $0xd8] sm:$0xff]
    %v51 = vld [vmem:[%s1 + $0xe0] sm:$0xff]
    %v52 = vld [vmem:[%s1 + $0xe8] sm:$0xff]
    %v53 = vld [vmem:[%s1 + $0xf0] sm:$0xff]
    %v54 = vld [vmem:[%s1 + $0xf8] sm:$0xff]
    %v55 = vld [vmem:[#allocation2] sm:$0xff]
    %v56 = vld [vmem:[#allocation2 + $0x8] sm:$0xff]
    %v57 = vld [vmem:[#allocation2 + $0x10] sm:$0xff]
    %v58 = vld [vmem:[#allocation2 + $0x18] sm:$0xff]
    %v59 = vld [vmem:[%s0] sm:$0xff]
    %v60 = vld [vmem:[%s0 + $0x8] sm:$0xff]
    %vm61 = vcmask 261120
    %v63 = vsel %vm61, %v59, 0
    %v66 = vsel %vm61, %v60, 0
    %v69 = vsel %vm61, %v23, 0
    %v72 = vsel %vm61, %v24, 0
    %v75 = vsel %vm61, %v25, 0
    %v78 = vsel %vm61, %v26, 0
    %v81 = vsel %vm61, %v27, 0
    %v84 = vsel %vm61, %v28, 0
    %v87 = vsel %vm61, %v29, 0
    %v90 = vsel %vm61, %v30, 0
    %v93 = vsel %vm61, %v31, 0
    %v96 = vsel %vm61, %v32, 0
    %v99 = vsel %vm61, %v33, 0
    %v102 = vsel %vm61, %v34, 0
    %v105 = vsel %vm61, %v35, 0
    %v108 = vsel %vm61, %v36, 0
    %v111 = vsel %vm61, %v37, 0
    %v114 = vsel %vm61, %v38, 0
    %v117 = vsel %vm61, %v39, 0
    %v120 = vsel %vm61, %v40, 0
    %v123 = vsel %vm61, %v41, 0
    %v126 = vsel %vm61, %v42, 0
    %v129 = vsel %vm61, %v43, 0
    %v132 = vsel %vm61, %v44, 0
    %v135 = vsel %vm61, %v45, 0
    %v138 = vsel %vm61, %v46, 0
    %v141 = vsel %vm61, %v47, 0
    %v144 = vsel %vm61, %v48, 0
    %v147 = vsel %vm61, %v49, 0
    %v150 = vsel %vm61, %v50, 0
    %v153 = vsel %vm61, %v51, 0
    %v156 = vsel %vm61, %v52, 0
    %v159 = vsel %vm61, %v53, 0
    %v162 = vsel %vm61, %v54, 0
    %164 = vmatprep.subr.mxu0 0.0
    %165 = vmatpush1.xpose.msra.mxu0 %v69
    %166 = vmatprep.subr.mxu0 0.0
    %167 = vmatpush1.xpose.msra.mxu0 %v72
    %168 = vmatprep.subr.mxu0 0.0
    %169 = vmatpush1.xpose.msra.mxu0 %v75
    %170 = vmatprep.subr.mxu0 0.0
    %171 = vmatpush1.xpose.msra.mxu0 %v78
    %172 = vmatprep.subr.mxu0 0.0
    %173 = vmatpush1.xpose.msra.mxu0 %v81
    %174 = vmatprep.subr.mxu0 0.0
    %175 = vmatpush1.xpose.msra.mxu0 %v84
    %176 = vmatprep.subr.mxu0 0.0
    %177 = vmatpush1.xpose.msra.mxu0 %v87
    %178 = vmatprep.subr.mxu0 0.0
    %179 = vmatpush1.xpose.msra.mxu0 %v90
    %180 = vmatprep.subr.mxu0 0.0
    %181 = vmatpush1.xpose.msra.mxu0 %v93
    %182 = vmatprep.subr.mxu0 0.0
    %183 = vmatpush1.xpose.msra.mxu0 %v96
    %184 = vmatprep.subr.mxu0 0.0
    %185 = vmatpush1.xpose.msra.mxu0 %v99
    %186 = vmatprep.subr.mxu0 0.0
    %187 = vmatpush1.xpose.msra.mxu0 %v102
    %188 = vmatprep.subr.mxu0 0.0
    %189 = vmatpush1.xpose.msra.mxu0 %v105
    %190 = vmatprep.subr.mxu0 0.0
    %191 = vmatpush1.xpose.msra.mxu0 %v108
    %192 = vmatprep.subr.mxu0 0.0
    %193 = vmatpush1.xpose.msra.mxu0 %v111
    %194 = vmatprep.subr.mxu0 0.0
    %195 = vmatpush1.xpose.msra.mxu0 %v114
    %196 = vmatprep.subr.mxu0 0.0
    %197 = vmatpush1.xpose.msra.mxu0 %v117
    %198 = vmatprep.subr.mxu0 0.0
    %199 = vmatpush1.xpose.msra.mxu0 %v120
    %200 = vmatprep.subr.mxu0 0.0
    %201 = vmatpush1.xpose.msra.mxu0 %v123
    %202 = vmatprep.subr.mxu0 0.0
    %203 = vmatpush1.xpose.msra.mxu0 %v126
    %204 = vmatprep.subr.mxu0 0.0
    %205 = vmatpush1.xpose.msra.mxu0 %v129
    %206 = vmatprep.subr.mxu0 0.0
    %207 = vmatpush1.xpose.msra.mxu0 %v132
    %208 = vmatprep.subr.mxu0 0.0
    %209 = vmatpush1.xpose.msra.mxu0 %v135
    %210 = vmatprep.subr.mxu0 0.0
    %211 = vmatpush1.xpose.msra.mxu0 %v138
    %212 = vmatprep.subr.mxu0 0.0
    %213 = vmatpush1.xpose.msra.mxu0 %v141
    %214 = vmatprep.subr.mxu0 0.0
    %215 = vmatpush1.xpose.msra.mxu0 %v144
    %216 = vmatprep.subr.mxu0 0.0
    %217 = vmatpush1.xpose.msra.mxu0 %v147
    %218 = vmatprep.subr.mxu0 0.0
    %219 = vmatpush1.xpose.msra.mxu0 %v150
    %220 = vmatprep.subr.mxu0 0.0
    %221 = vmatpush1.xpose.msra.mxu0 %v153
    %222 = vmatprep.subr.mxu0 0.0
    %223 = vmatpush1.xpose.msra.mxu0 %v156
    %224 = vmatprep.subr.mxu0 0.0
    %225 = vmatpush1.xpose.msra.mxu0 %v159
    %226 = vmatprep.subr.mxu0 0.0
    %227 = vmatpush1.xpose.msra.mxu0 %v162
    %228 = vmatprep.mubr.f32.mxu0 0.0
    %229 = vmatmul.mubr.f32.gmra.mrb[0].mxu0 %v63
    %v230 = vpop.f32.mrb[0].mxu0
    %v231 = vadd.f32 0.0, %v230
    %v232 = vpop.f32.mrb[0].mxu0
    %v233 = vadd.f32 0.0, %v232
    %234 = vmatprep.mubr.f32.mxu0 0.0
    %235 = vmatmul.mubr.f32.gmra.mrb[0].mxu0 %v66
    %v236 = vpop.f32.mrb[0].mxu0
    %v237 = vadd.f32 0.0, %v236
    %v238 = vpop.f32.mrb[0].mxu0
    %v239 = vadd.f32 0.0, %v238
    %240 = vdwg.mxu0
    %v241 = vadd.f32 %v55, %v231
    %v242 = vadd.f32 %v56, %v233
    %v243 = vadd.f32 %v57, %v237
    %v244 = vadd.f32 %v58, %v239
    %245 = vst [vmem:[#allocation2] sm:$0xff] %v241
    %246 = vst [vmem:[#allocation2 + $0x8] sm:$0xff] %v242
    %247 = vst [vmem:[#allocation2 + $0x10] sm:$0xff] %v243
    %248 = vst [vmem:[#allocation2 + $0x18] sm:$0xff] %v244
    // Predicated region
    $region18: #{tpu_custom_call.1} parent=1 // pred_check
      %p249 = pneg %p15
    $region19: #{tpu_custom_call.1} parent=1 // pred_check_branch
      %251 = sbr.rel (%p249) target = $region21
    $region20: #{tpu_custom_call.1} parent=1 // pred_region
      %v252 = vld [vmem:[#allocation2] sm:$0xff]
      %v253 = vld [vmem:[#allocation2 + $0x8] sm:$0xff]
      %v254 = vld [vmem:[#allocation2 + $0x10] sm:$0xff]
      %v255 = vld [vmem:[#allocation2 + $0x18] sm:$0xff]
      %v256 = vld [vmem:[%s2] sm:$0x3]
      %v257 = vlaneseq
      %v258 = vshrl.u32 %v257, 7
      %v259 = vsub.s32 0, %v258
      %v260 = vrot.slane %v256, %v259
      %v261 = vadd.f32 %v252, %v260
      %v262 = vadd.f32 %v254, %v260
      %v263 = vlaneseq
      %v264 = vshrl.u32 %v263, 7
      %v265 = vsub.s32 1, %v264
      %v266 = vrot.slane %v256, %v265
      %v267 = vadd.f32 %v253, %v266
      %v268 = vadd.f32 %v255, %v266
      %v269 = vmul.f32 %v267, 0.5
      %v270 = vmul.f32 %v268, 0.5
      %v271 = vmul.f32 %v267, 0.70710677
      %v272 = vmul.f32 %v268, 0.70710677
      %v273 = verf.f32.pop %v271
      %v274 = verf.f32.pop %v272
      %v275 = vadd.f32 %v273, 1.0
      %v276 = vadd.f32 %v274, 1.0
      %v277 = vmul.f32 %v269, %v275
      %v278 = vmul.f32 %v270, %v276
      %v279 = vmul.f32 %v261, %v277
      %v280 = vmul.f32 %v262, %v278
      %281 = vst [vmem:[#allocation3] sm:$0xff] %v279
      %282 = vst [vmem:[#allocation3 + $0x8] sm:$0xff] %v280
    $region21: #{tpu_custom_call.1} parent=1 // pred_fallthru
      _
    // Predicated region
    $region22: #{tpu_custom_call.1} parent=1 // pred_check
      _
    $region23: #{tpu_custom_call.1} parent=1 // pred_check_branch
      %284 = sbr.rel (0) target = $region25
    $region24: #{tpu_custom_call.1} parent=1 // pred_region
      %s286 = ssub.s32 256, 256
      %287 = vsyncadd [#allocation4], %s286
      %s288 = sshll.u32 [#allocation3], 4
      %s289 = int_to_ptr.vmem [resolvable:$true] %s288
      %294 = dma.vmem_to_hbm [thread:$0]  %s289, 256, %s3, [#allocation4], 128, 128, 8
    $region25: #{tpu_custom_call.1} parent=1 // pred_fallthru
      _
    // Predicated region
    $region26: #{tpu_custom_call.1} parent=1 // pred_check
      _
    $region27: #{tpu_custom_call.1} parent=1 // pred_check_branch
      %296 = sbr.rel (0) target = $region29
    $region28: #{tpu_custom_call.1} parent=1 // pred_region
      %297 = dma.done [#allocation4], 256
    $region29: #{tpu_custom_call.1} parent=1 // pred_fallthru
      _
    %298 = vsyncpa [#allocation4], 1

</llo_original>
